<compile_context>
chip_gen: v6e
topology: v6e:2x2x1
jax: 0.10.0
libtpu: 0.0.40
codegen_flags: <defaults>
</compile_context>

<pallas_src>
import functools

import jax
import jax.numpy as jnp
from jax.experimental import pallas as pl
from jax.experimental.pallas import tpu as pltpu

EPS = 1e-8


def _round_up(v, m):
    return (v + m - 1) // m * m


def _vmem_capacity_bytes():
    try:
        info = pltpu.get_tpu_info()
        cap = int(getattr(info, "vmem_capacity_bytes", 0))
        if cap > 0:
            return cap
    except Exception:
        pass
    return 128 * 1024 * 1024


def _tile_candidates(n_pad):
    """Divisors of n_pad that are multiples of 128 (n_pad is one itself)."""
    return sorted(d for d in range(128, n_pad + 1, 128) if n_pad % d == 0)


def _largest_le(cands, target):
    best = cands[0]
    for d in cands:
        if d <= target:
            best = d
    return best


def _uhg_sage_kernel(a_ref, p_ref, xi_ref, ws_ref, b_ref, invdeg_ref,
                     out_ref, acc_ref, *, out_ch, apply_uhg_relu, p_resident,
                     tile_k):
    """One UHGSAGEConv layer (+ optional trailing uhg_relu), K-accumulated.

    a_ref:      [TILE_N, TILE_K]          bf16  0/1 edge-count adjacency tile
    p_ref:      [N_pad, O_pad] (resident) bf16  P = x @ Wa
                or [TILE_K, O_pad] (streamed slab)
    xi_ref:     [TILE_N, C_pad]           bf16  node features (row slab)
    ws_ref:     [C_pad, O_pad]            bf16  self-path weight
    b_ref:      [1, O_pad]                f32   bias
    invdeg_ref: [TILE_N, 1]               f32   1 / clamp(in_degree, 1)
    out_ref:    [TILE_N, O_pad]           f32 or bf16
    acc_ref:    [TILE_N, O_pad]           f32   scratch accumulator
    """
    k = pl.program_id(1)
    nk = pl.num_programs(1)

    @pl.when(k == 0)
    def _():
        acc_ref[...] = jnp.zeros_like(acc_ref)

    if p_resident:
        off = pl.multiple_of(k * tile_k, tile_k)
        pk = p_ref[pl.ds(off, tile_k), :]
    else:
        pk = p_ref[...]

    # Aggregation (projection hoisted to the wrapper): A[i, kslab] @ P[kslab]
    acc_ref[...] += jnp.dot(a_ref[...], pk, preferred_element_type=jnp.float32)

    @pl.when(k == nk - 1)
    def _():
        o_pad = out_ref.shape[-1]

        # mean aggregation: per-row f32 scale (1 / clamp(degree, 1))
        agg = acc_ref[...] * invdeg_ref[...]

        # linear(cat([x, agg])) == x @ Ws + agg @ Wa + b ; then F.relu
        lin = (jnp.dot(xi_ref[...], ws_ref[...],
                       preferred_element_type=jnp.float32)
               + b_ref[...] + agg)
        f = jnp.maximum(lin, 0.0)            # padded lanes stay exactly 0

        col = jax.lax.broadcasted_iota(jnp.int32, (1, o_pad), 1)
        real = col < out_ch                  # real feature lanes

        # append_uhg + uhg_normalize: h == 1 -> norm = sqrt(clamp(sum f^2 - 1, eps))
        s2 = jnp.sum(f * f, axis=-1, keepdims=True)
        f = f * jax.lax.rsqrt(jnp.maximum(s2 - 1.0, EPS))

        # normalize_points (sign(h) == 1 -> no sign flip)
        zero_mask = jnp.sum(jnp.abs(f), axis=-1, keepdims=True) == 0.0
        f = jnp.where(zero_mask & real, 1.0, f)
        s2 = jnp.sum(f * f, axis=-1, keepdims=True)
        f = f * jax.lax.rsqrt(jnp.maximum(s2, EPS * EPS))

        if apply_uhg_relu:
            # uhg_relu: relu is a no-op here (f >= 0 already); re-normalize,
            # h / |h| == 1 (folded away).
            s2 = jnp.sum(f * f, axis=-1, keepdims=True)
            f = f * jax.lax.rsqrt(jnp.maximum(s2, EPS * EPS))

        # single lane-dense store: features, h == 1 at column `out_ch`,
        # zeros in the padding lanes.
        h_col = (col == out_ch).astype(jnp.float32)
        out_ref[...] = (f + h_col).astype(out_ref.dtype)


def uhg_sage_layer(x_pad, adj, inv_deg, w, b, c_real, apply_uhg_relu,
                   out_dtype):
    """One layer.  x_pad: [N_pad, C_pad], adj: [N_pad, N_pad] bf16 0/1 counts."""
    n_pad, c_pad = x_pad.shape
    out_ch = int(w.shape[0])
    o_pad = _round_up(out_ch + 1, 128)

    w = jnp.asarray(w, jnp.float32)
    ws = jnp.zeros((c_pad, o_pad), jnp.float32).at[:c_real, :out_ch].set(
        w[:, :c_real].T).astype(jnp.bfloat16)
    wa = jnp.zeros((c_pad, o_pad), jnp.float32).at[:c_real, :out_ch].set(
        w[:, c_real:].T).astype(jnp.bfloat16)
    b_pad = jnp.zeros((1, o_pad), jnp.float32).at[0, :out_ch].set(
        jnp.asarray(b, jnp.float32))

    x_bf = x_pad.astype(jnp.bfloat16)
    # Hoisted aggregation projection: one small bf16 matmul per layer.
    p = jnp.dot(x_bf, wa, preferred_element_type=jnp.float32).astype(
        jnp.bfloat16)

    cap = _vmem_capacity_bytes()
    budget = int(0.45 * cap)                 # ~29 MiB on v7x, ~58 MiB on v5e/v6e
    out_bytes = jnp.dtype(out_dtype).itemsize

    # Keep P resident in VMEM when comfortably small; otherwise stream slabs.
    p_resident = (2 * n_pad * o_pad * 2) <= budget // 3

    cands = _tile_candidates(n_pad)
    tile_n = _largest_le(cands, 1024)
    if n_pad >= 256:
        # v7x megacore: guarantee >=2 row tiles for the "parallel" axis.
        tile_n = min(tile_n, _largest_le(cands, n_pad // 2))
    tile_k = _largest_le(cands, 2048)

    def est(tn, tk):
        e = 2 * tn * tk * 2                                         # A (2 bufs)
        e += (2 * n_pad * o_pad * 2) if p_resident else (2 * tk * o_pad * 2)
        e += 2 * tn * c_pad * 2                                     # x row slab
        e += 2 * c_pad * o_pad * 2                                  # Ws
        e += 2 * o_pad * 4 + 2 * tn * 4                             # bias + 1/deg
        e += 2 * tn * o_pad * out_bytes                             # out tile
        e += tn * o_pad * 4                                         # acc scratch
        return e

    def shrink(t):
        smaller = [d for d in cands if d < t]
        return smaller[-1] if smaller else t

    while est(tile_n, tile_k) > budget:
        if tile_k > cands[0] and tile_k >= tile_n:
            tile_k = shrink(tile_k)
        elif tile_n > cands[0]:
            tile_n = shrink(tile_n)
        else:
            break

    e = est(tile_n, tile_k)
    vmem_limit = int(min(max(2 * e, 32 * 1024 * 1024), int(0.7 * cap)))
    vmem_limit = max(vmem_limit, e + (2 << 20))

    grid = (n_pad // tile_n, n_pad // tile_k)
    grid_i = grid[0]

    flops = 2 * n_pad * n_pad * o_pad + 2 * n_pad * c_pad * o_pad
    p_bytes = n_pad * o_pad * 2 * (1 if p_resident else grid_i)
    bytes_accessed = (n_pad * n_pad * 2
                      + p_bytes
                      + n_pad * c_pad * 2
                      + grid_i * c_pad * o_pad * 2
                      + n_pad * o_pad * out_bytes
                      + n_pad * 4)
    cost = pl.CostEstimate(flops=flops, transcendentals=3 * n_pad,
                           bytes_accessed=int(bytes_accessed))

    p_spec = (pl.BlockSpec((n_pad, o_pad), lambda i, k: (0, 0)) if p_resident
              else pl.BlockSpec((tile_k, o_pad), lambda i, k: (k, 0)))

    kernel = functools.partial(_uhg_sage_kernel, out_ch=out_ch,
                               apply_uhg_relu=apply_uhg_relu,
                               p_resident=p_resident, tile_k=tile_k)

    return pl.pallas_call(
        kernel,
        out_shape=jax.ShapeDtypeStruct((n_pad, o_pad), out_dtype),
        grid_spec=pltpu.PrefetchScalarGridSpec(
            num_scalar_prefetch=0,
            grid=grid,
            in_specs=[
                pl.BlockSpec((tile_n, tile_k), lambda i, k: (i, k)),  # A
                p_spec,                                                # P = x@Wa
                pl.BlockSpec((tile_n, c_pad), lambda i, k: (i, 0)),    # x rows
                pl.BlockSpec((c_pad, o_pad), lambda i, k: (0, 0)),     # Ws
                pl.BlockSpec((1, o_pad), lambda i, k: (0, 0)),         # bias
                pl.BlockSpec((tile_n, 1), lambda i, k: (i, 0)),        # 1/deg
            ],
            out_specs=pl.BlockSpec((tile_n, o_pad), lambda i, k: (i, 0)),
            scratch_shapes=[pltpu.VMEM((tile_n, o_pad), jnp.float32)],
        ),
        compiler_params=pltpu.CompilerParams(
            dimension_semantics=("parallel", "arbitrary"),
            vmem_limit_bytes=vmem_limit,
        ),
        cost_estimate=cost,
    )(adj, p, x_bf, ws, b_pad, inv_deg)


def uhg_model_forward(x, edge_index, params):
    """UHGModel.forward: conv -> uhg_relu for all but last layer, then conv."""
    n, c = x.shape
    n_pad = _round_up(max(n, 1), 128)
    c_pad = _round_up(c, 128)

    row, col = edge_index[0], edge_index[1]
    num_e = row.shape[0]

    # index_add_ scatter as a dense 0/1 edge-count adjacency, built directly
    # in its bf16 storage dtype (no f32 N^2 temporary).
    adj = jnp.zeros((n_pad, n_pad), jnp.bfloat16).at[row, col].add(
        jnp.ones((num_e,), jnp.bfloat16))
    # Degree via O(E) segment-sum; 1/clamp(deg,1) applied in-kernel in f32.
    deg = jnp.zeros((n_pad,), jnp.float32).at[row].add(1.0)
    inv_deg = (1.0 / jnp.maximum(deg, 1.0)).reshape(n_pad, 1)

    x_pad = jnp.zeros((n_pad, c_pad), jnp.bfloat16).at[:n, :c].set(
        x.astype(jnp.bfloat16))

    num_layers = len(params)
    c_real = c
    for i, (w, b) in enumerate(params):
        is_last = i == num_layers - 1
        x_pad = uhg_sage_layer(
            x_pad, adj, inv_deg, w, b, c_real,
            apply_uhg_relu=not is_last,
            out_dtype=jnp.float32 if is_last else jnp.bfloat16)
        c_real = int(w.shape[0]) + 1       # features + homogeneous coordinate
        c_pad = x_pad.shape[1]

    return x_pad[:n, :c_real]


def init_params(key, in_channels, hidden_channels, out_channels, num_layers=2):
    """Deterministic synthetic parameters matching UHGModel's layer shapes.

    Layer i weight: [out_i, 2 * in_i]; rows normalized to unit L2 norm
    (mimicking the orthogonal-then-row-normalize init); biases zero.
    """
    dims = [(in_channels, hidden_channels)]
    for _ in range(num_layers - 2):
        dims.append((hidden_channels + 1, hidden_channels))
    dims.append((hidden_channels + 1, out_channels))

    params = []
    for ic, oc in dims:
        key, k = jax.random.split(key)
        w = jax.random.normal(k, (oc, 2 * ic), jnp.float32)
        w = w / jnp.maximum(jnp.linalg.norm(w, axis=1, keepdims=True), EPS)
        b = jnp.zeros((oc,), jnp.float32)
        params.append((w, b))
    return params


if __name__ == "__main__":
    key = jax.random.PRNGKey(0)
    kx, ke1, ke2, kp = jax.random.split(key, 4)

    num_nodes, in_ch, hidden_ch, out_ch = 8, 4, 32, 16
    num_edges = 16

    x = jax.random.normal(kx, (num_nodes, in_ch), jnp.float32)
    src = jax.random.randint(ke1, (num_edges,), 0, num_nodes, dtype=jnp.int32)
    dst = jax.random.randint(ke2, (num_edges,), 0, num_nodes, dtype=jnp.int32)
    edge_index = jnp.stack([src, dst], axis=0)  # [2, E], (row, col)

    params = init_params(kp, in_ch, hidden_ch, out_ch, num_layers=2)

    out = uhg_model_forward(x, edge_index, params)   # [N, out_ch + 1]
    jax.block_until_ready(out)
    assert out.shape == (num_nodes, out_ch + 1)
    assert bool(jnp.all(jnp.isfinite(out)))
    print("KERNEL_OK")
</pallas_src>

<mosaic_0001>
module attributes {stable_mosaic.version = 11 : i64} {
  func.func @_uhg_sage_kernel(%arg0: i32, %arg1: i32, %arg2: memref<128x128xbf16, #tpu.memory_space<vmem>>, %arg3: memref<128x128xbf16, #tpu.memory_space<vmem>>, %arg4: memref<128x128xbf16, #tpu.memory_space<vmem>>, %arg5: memref<128x128xbf16, #tpu.memory_space<vmem>>, %arg6: memref<1x128xf32, #tpu.memory_space<vmem>>, %arg7: memref<128x1xf32, #tpu.memory_space<vmem>>, %arg8: memref<128x128xbf16, #tpu.memory_space<vmem>>, %arg9: memref<128x128xf32, #tpu.memory_space<vmem>>) attributes {dimension_semantics = [#tpu.dimension_semantics<parallel>, #tpu.dimension_semantics<arbitrary>], iteration_bounds = array<i64: 1, 1>, scalar_prefetch = 0 : i64, scratch_operands = 1 : i64, tpu.core_type = #tpu.core_type<tc>, window_params = [{transform_indices = @transform_0, window_bounds = array<i64: 128, 128>}, {pipeline_mode = #tpu.pipeline_mode<synchronous>, transform_indices = @transform_1, window_bounds = array<i64: 128, 128>}, {transform_indices = @transform_2, window_bounds = array<i64: 128, 128>}, {pipeline_mode = #tpu.pipeline_mode<synchronous>, transform_indices = @transform_3, window_bounds = array<i64: 128, 128>}, {pipeline_mode = #tpu.pipeline_mode<synchronous>, transform_indices = @transform_4, window_bounds = array<i64: 1, 128>}, {transform_indices = @transform_5, window_bounds = array<i64: 128, 1>}, {transform_indices = @transform_6, window_bounds = array<i64: 128, 128>}]} {
    %c0_i32 = arith.constant 0 : i32
    %0 = arith.cmpi eq, %arg1, %c0_i32 : i32
    %1 = arith.extui %0 : i1 to i32
    %c0_i32_0 = arith.constant 0 : i32
    %2 = arith.cmpi ne, %1, %c0_i32_0 : i32
    scf.if %2 {
      %cst_9 = arith.constant 0.000000e+00 : f32
      %15 = vector.broadcast %cst_9 : f32 to vector<128x128xf32>
      %c0_10 = arith.constant 0 : index
      %c0_11 = arith.constant 0 : index
      %16 = vector.load %arg9[%c0_10, %c0_11] : memref<128x128xf32, #tpu.memory_space<vmem>>, vector<128x128xf32>
      tpu.vector_store %arg9[%c0_10, %c0_11], %15 {strides = array<i32>} : memref<128x128xf32, #tpu.memory_space<vmem>>, vector<128x128xf32>,
    } else {
    }
    %c128_i32 = arith.constant 128 : i32
    %3 = arith.muli %arg1, %c128_i32 : i32
    %4 = tpu.assume_multiple %3, 128 : i32
    %5 = arith.index_cast %4 : i32 to index
    %c0 = arith.constant 0 : index
    %6 = vector.load %arg3[%5, %c0] : memref<128x128xbf16, #tpu.memory_space<vmem>>, vector<128x128xbf16>
    %c0_1 = arith.constant 0 : index
    %c0_2 = arith.constant 0 : index
    %7 = vector.load %arg9[%c0_1, %c0_2] : memref<128x128xf32, #tpu.memory_space<vmem>>, vector<128x128xf32>
    %c0_3 = arith.constant 0 : index
    %c0_4 = arith.constant 0 : index
    %8 = vector.load %arg2[%c0_3, %c0_4] : memref<128x128xbf16, #tpu.memory_space<vmem>>, vector<128x128xbf16>
    %cst = arith.constant dense<0.000000e+00> : vector<128x128xf32>
    %9 = tpu.matmul %8, %6, %cst {dimension_numbers = #tpu.dot_dimension_numbers<[1], [0], [0], [1], [0, 0, 1, 1], [], []>} : vector<128x128xbf16>, vector<128x128xbf16>, vector<128x128xf32> -> vector<128x128xf32>
    %10 = arith.addf %7, %9 : vector<128x128xf32>
    %c0_5 = arith.constant 0 : index
    %c0_6 = arith.constant 0 : index
    %11 = vector.load %arg9[%c0_5, %c0_6] : memref<128x128xf32, #tpu.memory_space<vmem>>, vector<128x128xf32>
    tpu.vector_store %arg9[%c0_5, %c0_6], %10 {strides = array<i32>} : memref<128x128xf32, #tpu.memory_space<vmem>>, vector<128x128xf32>,
    %c0_i32_7 = arith.constant 0 : i32
    %12 = arith.cmpi eq, %arg1, %c0_i32_7 : i32
    %13 = arith.extui %12 : i1 to i32
    %c0_i32_8 = arith.constant 0 : i32
    %14 = arith.cmpi ne, %13, %c0_i32_8 : i32
    scf.if %14 {
      %c0_9 = arith.constant 0 : index
      %c0_10 = arith.constant 0 : index
      %15 = vector.load %arg9[%c0_9, %c0_10] : memref<128x128xf32, #tpu.memory_space<vmem>>, vector<128x128xf32>
      %c0_11 = arith.constant 0 : index
      %c0_12 = arith.constant 0 : index
      %16 = vector.load %arg7[%c0_11, %c0_12] : memref<128x1xf32, #tpu.memory_space<vmem>>, vector<128x1xf32>
      %17 = vector.broadcast %16 : vector<128x1xf32> to vector<128x128xf32>
      %18 = arith.mulf %15, %17 : vector<128x128xf32>
      %c0_13 = arith.constant 0 : index
      %c0_14 = arith.constant 0 : index
      %19 = vector.load %arg4[%c0_13, %c0_14] : memref<128x128xbf16, #tpu.memory_space<vmem>>, vector<128x128xbf16>
      %c0_15 = arith.constant 0 : index
      %c0_16 = arith.constant 0 : index
      %20 = vector.load %arg5[%c0_15, %c0_16] : memref<128x128xbf16, #tpu.memory_space<vmem>>, vector<128x128xbf16>
      %cst_17 = arith.constant dense<0.000000e+00> : vector<128x128xf32>
      %21 = tpu.matmul %19, %20, %cst_17 {dimension_numbers = #tpu.dot_dimension_numbers<[1], [0], [0], [1], [0, 0, 1, 1], [], []>} : vector<128x128xbf16>, vector<128x128xbf16>, vector<128x128xf32> -> vector<128x128xf32>
      %c0_18 = arith.constant 0 : index
      %c0_19 = arith.constant 0 : index
      %22 = vector.load %arg6[%c0_18, %c0_19] : memref<1x128xf32, #tpu.memory_space<vmem>>, vector<1x128xf32>
      %23 = vector.broadcast %22 : vector<1x128xf32> to vector<128x128xf32>
      %24 = arith.addf %21, %23 : vector<128x128xf32>
      %25 = arith.addf %24, %18 : vector<128x128xf32>
      %cst_20 = arith.constant 0.000000e+00 : f32
      %26 = vector.broadcast %cst_20 : f32 to vector<128x128xf32>
      %27 = arith.maximumf %25, %26 : vector<128x128xf32>
      %28 = tpu.iota {dimensions = array<i32: 1>} : vector<1x128xi32>
      %c32_i32 = arith.constant 32 : i32
      %29 = vector.broadcast %c32_i32 : i32 to vector<1x128xi32>
      %30 = arith.cmpi slt, %28, %29 : vector<1x128xi32>
      %31 = arith.mulf %27, %27 : vector<128x128xf32>
      %cst_21 = arith.constant dense<0.000000e+00> : vector<128xf32>
      %32 = vector.multi_reduction <add>, %31, %cst_21 [1] : vector<128x128xf32> to vector<128xf32>
      %33 = vector.shape_cast %32 : vector<128xf32> to vector<128x1xf32>
      %cst_22 = arith.constant 1.000000e+00 : f32
      %34 = vector.broadcast %cst_22 : f32 to vector<128x1xf32>
      %35 = arith.subf %33, %34 : vector<128x1xf32>
      %cst_23 = arith.constant 9.99999993E-9 : f32
      %36 = vector.broadcast %cst_23 : f32 to vector<128x1xf32>
      %37 = arith.maximumf %35, %36 : vector<128x1xf32>
      %38 = math.rsqrt %37 : vector<128x1xf32>
      %39 = vector.broadcast %38 : vector<128x1xf32> to vector<128x128xf32>
      %40 = arith.mulf %27, %39 : vector<128x128xf32>
      %41 = math.absf %40 : vector<128x128xf32>
      %cst_24 = arith.constant dense<0.000000e+00> : vector<128xf32>
      %42 = vector.multi_reduction <add>, %41, %cst_24 [1] : vector<128x128xf32> to vector<128xf32>
      %43 = vector.shape_cast %42 : vector<128xf32> to vector<128x1xf32>
      %cst_25 = arith.constant 0.000000e+00 : f32
      %44 = vector.broadcast %cst_25 : f32 to vector<128x1xf32>
      %45 = arith.cmpf oeq, %43, %44 : vector<128x1xf32>
      %46 = vector.broadcast %45 : vector<128x1xi1> to vector<128x128xi1>
      %47 = vector.broadcast %30 : vector<1x128xi1> to vector<128x128xi1>
      %48 = arith.andi %46, %47 : vector<128x128xi1>
      %cst_26 = arith.constant 1.000000e+00 : f32
      %49 = vector.broadcast %cst_26 : f32 to vector<128x128xf32>
      %50 = arith.select %48, %49, %40 : vector<128x128xi1>, vector<128x128xf32>
      %51 = arith.mulf %50, %50 : vector<128x128xf32>
      %cst_27 = arith.constant dense<0.000000e+00> : vector<128xf32>
      %52 = vector.multi_reduction <add>, %51, %cst_27 [1] : vector<128x128xf32> to vector<128xf32>
      %53 = vector.shape_cast %52 : vector<128xf32> to vector<128x1xf32>
      %cst_28 = arith.constant 1.000000e-16 : f32
      %54 = vector.broadcast %cst_28 : f32 to vector<128x1xf32>
      %55 = arith.maximumf %53, %54 : vector<128x1xf32>
      %56 = math.rsqrt %55 : vector<128x1xf32>
      %57 = vector.broadcast %56 : vector<128x1xf32> to vector<128x128xf32>
      %58 = arith.mulf %50, %57 : vector<128x128xf32>
      %59 = arith.mulf %58, %58 : vector<128x128xf32>
      %cst_29 = arith.constant dense<0.000000e+00> : vector<128xf32>
      %60 = vector.multi_reduction <add>, %59, %cst_29 [1] : vector<128x128xf32> to vector<128xf32>
      %61 = vector.shape_cast %60 : vector<128xf32> to vector<128x1xf32>
      %cst_30 = arith.constant 1.000000e-16 : f32
      %62 = vector.broadcast %cst_30 : f32 to vector<128x1xf32>
      %63 = arith.maximumf %61, %62 : vector<128x1xf32>
      %64 = math.rsqrt %63 : vector<128x1xf32>
      %65 = vector.broadcast %64 : vector<128x1xf32> to vector<128x128xf32>
      %66 = arith.mulf %58, %65 : vector<128x128xf32>
      %c32_i32_31 = arith.constant 32 : i32
      %67 = vector.broadcast %c32_i32_31 : i32 to vector<1x128xi32>
      %68 = arith.cmpi eq, %28, %67 : vector<1x128xi32>
      %69 = arith.extui %68 : vector<1x128xi1> to vector<1x128xi32>
      %70 = arith.sitofp %69 : vector<1x128xi32> to vector<1x128xf32>
      %71 = vector.broadcast %70 : vector<1x128xf32> to vector<128x128xf32>
      %72 = arith.addf %66, %71 : vector<128x128xf32>
      %73 = arith.truncf %72 : vector<128x128xf32> to vector<128x128xbf16>
      %c0_32 = arith.constant 0 : index
      %c0_33 = arith.constant 0 : index
      %74 = vector.load %arg8[%c0_32, %c0_33] : memref<128x128xbf16, #tpu.memory_space<vmem>>, vector<128x128xbf16>
      tpu.vector_store %arg8[%c0_32, %c0_33], %73 {strides = array<i32>} : memref<128x128xbf16, #tpu.memory_space<vmem>>, vector<128x128xbf16>,
    } else {
    }
    return
  }
  func.func @transform_0(%arg0: i32, %arg1: i32) -> (i32, i32) {
    %c0_i32 = arith.constant 0 : i32
    return %arg0, %arg1 : i32, i32
  }
  func.func @transform_1(%arg0: i32, %arg1: i32) -> (i32, i32) {
    %c0_i32 = arith.constant 0 : i32
    %c0_i32_0 = arith.constant 0 : i32
    %c0_i32_1 = arith.constant 0 : i32
    return %c0_i32, %c0_i32_0 : i32, i32
  }
  func.func @transform_2(%arg0: i32, %arg1: i32) -> (i32, i32) {
    %c0_i32 = arith.constant 0 : i32
    %c0_i32_0 = arith.constant 0 : i32
    return %arg0, %c0_i32 : i32, i32
  }
  func.func @transform_3(%arg0: i32, %arg1: i32) -> (i32, i32) {
    %c0_i32 = arith.constant 0 : i32
    %c0_i32_0 = arith.constant 0 : i32
    %c0_i32_1 = arith.constant 0 : i32
    return %c0_i32, %c0_i32_0 : i32, i32
  }
  func.func @transform_4(%arg0: i32, %arg1: i32) -> (i32, i32) {
    %c0_i32 = arith.constant 0 : i32
    %c0_i32_0 = arith.constant 0 : i32
    %c0_i32_1 = arith.constant 0 : i32
    return %c0_i32, %c0_i32_0 : i32, i32
  }
  func.func @transform_5(%arg0: i32, %arg1: i32) -> (i32, i32) {
    %c0_i32 = arith.constant 0 : i32
    %c0_i32_0 = arith.constant 0 : i32
    return %arg0, %c0_i32 : i32, i32
  }
  func.func @transform_6(%arg0: i32, %arg1: i32) -> (i32, i32) {
    %c0_i32 = arith.constant 0 : i32
    %c0_i32_0 = arith.constant 0 : i32
    return %arg0, %c0_i32 : i32, i32
  }
}

</mosaic_0001>

<llo_original>
// kernel: tpu_custom_call.1
$region0: #{tpu_custom_call.1}
  #allocation0 [shape = 'u32[]', space=smem, size = 0x4, offset = 0x4, fixed_abs, tag = 'smem constant byte address 0x4 - core index']
  #allocation1 [shape = 'u32[144,128]{1,0:T(1,128)}', space=vmem, size = 0x12000, scoped, tag = 'internal scratch']
  #allocation2 [shape = 'f32[128,128]{1,0:T(8,128)}', space=vmem, size = 0x10000, scoped, tag = 'scratch operand']
  %s0 = inlined_call_operand.vmem [shape: bf16[128,128], index: 0, kind: input, shape index: {}]
  %s1 = inlined_call_operand.vmem [shape: bf16[128,128], index: 1, kind: input, shape index: {}]
  %s2 = inlined_call_operand.hbm [shape: bf16[128,128], index: 2, kind: input, shape index: {}]
  %s3 = inlined_call_operand.hbm [shape: bf16[128,128], index: 3, kind: input, shape index: {}]
  %s4 = inlined_call_operand.vmem [shape: f32[1,128], index: 4, kind: input, shape index: {}]
  %s5 = inlined_call_operand.vmem [shape: f32[128,1], index: 5, kind: input, shape index: {}]
  %s6 = inlined_call_operand.hbm [shape: bf16[128,128], index: 6, kind: output, shape index: {}]
  %s7 = sld [smem:[#allocation0]]
  $region50: #{tpu_custom_call.1} parent=0
    _
  %s9 = ssub.s32 1, %s7
  %s10 = scalar_select 0, %s9, %s7
  $region1: #{tpu_custom_call.1} parent=0
    #allocation3 [shape = 'u8[32768]{0}', space=vmem, size = 0x8000, scoped, tag = 'input window, operand 2, single buffered']
    #allocation4 [shape = 's32[1]{0}', space=sflag, size = 0x4, scoped, tag = 'scoped memory for tpu_custom_call.1']
    #allocation5 [shape = 's32[1]{0}', space=sflag, size = 0x4, scoped, tag = 'scoped memory for tpu_custom_call.1']
    #allocation6 [shape = 'u8[32768]{0}', space=vmem, size = 0x8000, scoped, tag = 'input window, operand 3, single buffered']
    #allocation7 [shape = 's32[1]{0}', space=sflag, size = 0x4, scoped, tag = 'scoped memory for tpu_custom_call.1']
    #allocation8 [shape = 'u8[32768]{0}', space=vmem, size = 0x8000, scoped, tag = 'output window, operand 0, single buffered']
    %11 = vsyncpa [#allocation4], 0
    %12 = vsyncpa [#allocation7], 0
    %13 = vsyncpa [#allocation5], 0
    // Predicated region
    $region2: #{tpu_custom_call.1} parent=1 // pred_check
      _
    $region3: #{tpu_custom_call.1} parent=1 // pred_check_branch
      %15 = sbr.rel (0) target = $region5
    $region4: #{tpu_custom_call.1} parent=1 // pred_region
      _
    $region5: #{tpu_custom_call.1} parent=1 // pred_fallthru
      _
    // Predicated region
    $region6: #{tpu_custom_call.1} parent=1 // pred_check
      _
    $region7: #{tpu_custom_call.1} parent=1 // pred_check_branch
      %17 = sbr.rel (0) target = $region9
    $region8: #{tpu_custom_call.1} parent=1 // pred_region
      _
    $region9: #{tpu_custom_call.1} parent=1 // pred_fallthru
      _
    // Predicated region
    $region10: #{tpu_custom_call.1} parent=1 // pred_check
      _
    $region11: #{tpu_custom_call.1} parent=1 // pred_check_branch
      %19 = sbr.rel (0) target = $region13
    $region12: #{tpu_custom_call.1} parent=1 // pred_region
      %s21 = ssub.s32 1024, 1024
      %22 = vsyncadd [#allocation4], %s21
      %s23 = sshll.u32 [#allocation3], 4
      %s24 = int_to_ptr.vmem [resolvable:$true] %s23
      %29 = dma.hbm_to_vmem [thread:$0]  %s2, 1024, %s24, [#allocation4], 64, 64, 4
    $region13: #{tpu_custom_call.1} parent=1 // pred_fallthru
      _
    // Predicated region
    $region14: #{tpu_custom_call.1} parent=1 // pred_check
      _
    $region15: #{tpu_custom_call.1} parent=1 // pred_check_branch
      %31 = sbr.rel (0) target = $region17
    $region16: #{tpu_custom_call.1} parent=1 // pred_region
      %s33 = ssub.s32 1024, 1024
      %34 = vsyncadd [#allocation7], %s33
      %s35 = sshll.u32 [#allocation6], 4
      %s36 = int_to_ptr.vmem [resolvable:$true] %s35
      %41 = dma.hbm_to_vmem [thread:$0]  %s3, 1024, %s36, [#allocation7], 64, 64, 4
    $region17: #{tpu_custom_call.1} parent=1 // pred_fallthru
      _
    // Predicated region
    $region18: #{tpu_custom_call.1} parent=1 // pred_check
      _
    $region19: #{tpu_custom_call.1} parent=1 // pred_check_branch
      %43 = sbr.rel (0) target = $region21
    $region20: #{tpu_custom_call.1} parent=1 // pred_region
      _
    $region21: #{tpu_custom_call.1} parent=1 // pred_fallthru
      _
    // Predicated region
    $region22: #{tpu_custom_call.1} parent=1 // pred_check
      _
    $region23: #{tpu_custom_call.1} parent=1 // pred_check_branch
      %45 = sbr.rel (0) target = $region25
    $region24: #{tpu_custom_call.1} parent=1 // pred_region
      _
    $region25: #{tpu_custom_call.1} parent=1 // pred_fallthru
      _
    // Predicated region
    $region26: #{tpu_custom_call.1} parent=1 // pred_check
      _
    $region27: #{tpu_custom_call.1} parent=1 // pred_check_branch
      %47 = sbr.rel (0) target = $region29
    $region28: #{tpu_custom_call.1} parent=1 // pred_region
      %48 = dma.done [#allocation4], 1024
    $region29: #{tpu_custom_call.1} parent=1 // pred_fallthru
      _
    // Predicated region
    $region30: #{tpu_custom_call.1} parent=1 // pred_check
      _
    $region31: #{tpu_custom_call.1} parent=1 // pred_check_branch
      %50 = sbr.rel (0) target = $region33
    $region32: #{tpu_custom_call.1} parent=1 // pred_region
      %51 = dma.done [#allocation7], 1024
    $region33: #{tpu_custom_call.1} parent=1 // pred_fallthru
      _
    %p53 = scmp.eq.s32.totalorder 0, 0
    // Predicated region
    $region34: #{tpu_custom_call.1} parent=1 // pred_check
      %p54 = pneg %p53
    $region35: #{tpu_custom_call.1} parent=1 // pred_check_branch
      %56 = sbr.rel (%p54) target = $region37
    $region36: #{tpu_custom_call.1} parent=1 // pred_region
      %57 = vst [vmem:[#allocation2] sm:$0xff] 0.0
      %58 = vst [vmem:[#allocation2 + $0x8] sm:$0xff] 0.0
      %59 = vst [vmem:[#allocation2 + $0x10] sm:$0xff] 0.0
      %60 = vst [vmem:[#allocation2 + $0x18] sm:$0xff] 0.0
      %61 = vst [vmem:[#allocation2 + $0x20] sm:$0xff] 0.0
      %62 = vst [vmem:[#allocation2 + $0x28] sm:$0xff] 0.0
      %63 = vst [vmem:[#allocation2 + $0x30] sm:$0xff] 0.0
      %64 = vst [vmem:[#allocation2 + $0x38] sm:$0xff] 0.0
      %65 = vst [vmem:[#allocation2 + $0x40] sm:$0xff] 0.0
      %66 = vst [vmem:[#allocation2 + $0x48] sm:$0xff] 0.0
      %67 = vst [vmem:[#allocation2 + $0x50] sm:$0xff] 0.0
      %68 = vst [vmem:[#allocation2 + $0x58] sm:$0xff] 0.0
      %69 = vst [vmem:[#allocation2 + $0x60] sm:$0xff] 0.0
      %70 = vst [vmem:[#allocation2 + $0x68] sm:$0xff] 0.0
      %71 = vst [vmem:[#allocation2 + $0x70] sm:$0xff] 0.0
      %72 = vst [vmem:[#allocation2 + $0x78] sm:$0xff] 0.0
    $region37: #{tpu_custom_call.1} parent=1 // pred_fallthru
      _
    %s73 = smul.u32 0, 128
    %s74 = sshra.s32 %s73, 3
    %s75 = sand.u32 %s73, 7
    %s76 = smul.addr %s74, 4
    %s77 = scalar_lea.vmem %s1, %s76
    %v78 = vld [vmem:[%s77] sm:$0xf]
    %v79 = vld [vmem:[%s77 + $0x4] sm:$0xf]
    %v80 = vld [vmem:[%s77 + $0x8] sm:$0xf]
    %v81 = vld [vmem:[%s77 + $0xc] sm:$0xf]
    %v82 = vld [vmem:[%s77 + $0x10] sm:$0xf]
    %v83 = vld [vmem:[%s77 + $0x14] sm:$0xf]
    %v84 = vld [vmem:[%s77 + $0x18] sm:$0xf]
    %v85 = vld [vmem:[%s77 + $0x1c] sm:$0xf]
    %v86 = vld [vmem:[%s77 + $0x20] sm:$0xf]
    %v87 = vld [vmem:[%s77 + $0x24] sm:$0xf]
    %v88 = vld [vmem:[%s77 + $0x28] sm:$0xf]
    %v89 = vld [vmem:[%s77 + $0x2c] sm:$0xf]
    %v90 = vld [vmem:[%s77 + $0x30] sm:$0xf]
    %v91 = vld [vmem:[%s77 + $0x34] sm:$0xf]
    %v92 = vld [vmem:[%s77 + $0x38] sm:$0xf]
    %v93 = vld [vmem:[%s77 + $0x3c] sm:$0xf]
    %v94 = vld [vmem:[#allocation2] sm:$0xff]
    %v95 = vld [vmem:[#allocation2 + $0x8] sm:$0xff]
    %v96 = vld [vmem:[#allocation2 + $0x10] sm:$0xff]
    %v97 = vld [vmem:[#allocation2 + $0x18] sm:$0xff]
    %v98 = vld [vmem:[#allocation2 + $0x20] sm:$0xff]
    %v99 = vld [vmem:[#allocation2 + $0x28] sm:$0xff]
    %v100 = vld [vmem:[#allocation2 + $0x30] sm:$0xff]
    %v101 = vld [vmem:[#allocation2 + $0x38] sm:$0xff]
    %v102 = vld [vmem:[#allocation2 + $0x40] sm:$0xff]
    %v103 = vld [vmem:[#allocation2 + $0x48] sm:$0xff]
    %v104 = vld [vmem:[#allocation2 + $0x50] sm:$0xff]
    %v105 = vld [vmem:[#allocation2 + $0x58] sm:$0xff]
    %v106 = vld [vmem:[#allocation2 + $0x60] sm:$0xff]
    %v107 = vld [vmem:[#allocation2 + $0x68] sm:$0xff]
    %v108 = vld [vmem:[#allocation2 + $0x70] sm:$0xff]
    %v109 = vld [vmem:[#allocation2 + $0x78] sm:$0xff]
    %v110 = vld [vmem:[%s0] sm:$0xf]
    %v111 = vld [vmem:[%s0 + $0x4] sm:$0xf]
    %v112 = vld [vmem:[%s0 + $0x8] sm:$0xf]
    %v113 = vld [vmem:[%s0 + $0xc] sm:$0xf]
    %v114 = vld [vmem:[%s0 + $0x10] sm:$0xf]
    %v115 = vld [vmem:[%s0 + $0x14] sm:$0xf]
    %v116 = vld [vmem:[%s0 + $0x18] sm:$0xf]
    %v117 = vld [vmem:[%s0 + $0x1c] sm:$0xf]
    %v118 = vld [vmem:[%s0 + $0x20] sm:$0xf]
    %v119 = vld [vmem:[%s0 + $0x24] sm:$0xf]
    %v120 = vld [vmem:[%s0 + $0x28] sm:$0xf]
    %v121 = vld [vmem:[%s0 + $0x2c] sm:$0xf]
    %v122 = vld [vmem:[%s0 + $0x30] sm:$0xf]
    %v123 = vld [vmem:[%s0 + $0x34] sm:$0xf]
    %v124 = vld [vmem:[%s0 + $0x38] sm:$0xf]
    %v125 = vld [vmem:[%s0 + $0x3c] sm:$0xf]
    %v142 = vunpack.c.l.b16 %v110
    %v143 = vunpack.c.l.b16 %v111
    %v144 = vunpack.c.l.b16 %v112
    %v145 = vunpack.c.l.b16 %v113
    %v146 = vunpack.c.l.b16 %v114
    %v147 = vunpack.c.l.b16 %v115
    %v148 = vunpack.c.l.b16 %v116
    %v149 = vunpack.c.l.b16 %v117
    %v150 = vunpack.c.l.b16 %v118
    %v151 = vunpack.c.l.b16 %v119
    %v152 = vunpack.c.l.b16 %v120
    %v153 = vunpack.c.l.b16 %v121
    %v154 = vunpack.c.l.b16 %v122
    %v155 = vunpack.c.l.b16 %v123
    %v156 = vunpack.c.l.b16 %v124
    %v157 = vunpack.c.l.b16 %v125
    %v158 = vpack.c.b16 %v143, %v142
    %v159 = vpack.c.b16 %v145, %v144
    %v160 = vpack.c.b16 %v147, %v146
    %v161 = vpack.c.b16 %v149, %v148
    %v162 = vpack.c.b16 %v151, %v150
    %v163 = vpack.c.b16 %v153, %v152
    %v164 = vpack.c.b16 %v155, %v154
    %v165 = vpack.c.b16 %v157, %v156
    %v190 = vunpack.c.l.b16 %v78
    %v191 = vunpack.c.l.b16 %v79
    %v192 = vunpack.c.l.b16 %v80
    %v193 = vunpack.c.l.b16 %v81
    %v194 = vunpack.c.l.b16 %v82
    %v195 = vunpack.c.l.b16 %v83
    %v196 = vunpack.c.l.b16 %v84
    %v197 = vunpack.c.l.b16 %v85
    %v198 = vunpack.c.l.b16 %v86
    %v199 = vunpack.c.l.b16 %v87
    %v200 = vunpack.c.l.b16 %v88
    %v201 = vunpack.c.l.b16 %v89
    %v202 = vunpack.c.l.b16 %v90
    %v203 = vunpack.c.l.b16 %v91
    %v204 = vunpack.c.l.b16 %v92
    %v205 = vunpack.c.l.b16 %v93
    %v206 = vpack.c.b16 %v191, %v190
    %v207 = vpack.c.b16 %v193, %v192
    %v208 = vpack.c.b16 %v195, %v194
    %v209 = vpack.c.b16 %v197, %v196
    %v210 = vpack.c.b16 %v199, %v198
    %v211 = vpack.c.b16 %v201, %v200
    %v212 = vpack.c.b16 %v203, %v202
    %v213 = vpack.c.b16 %v205, %v204
    %222 = vmatprep.subr.bf16.mxu0 0
    %223 = vmatpush1.bf16.msra.mxu0 %v213
    %224 = vmatprep.subr.bf16.mxu0 0
    %225 = vmatpush1.bf16.msra.mxu0 %v212
    %226 = vmatprep.subr.bf16.mxu0 0
    %227 = vmatpush1.bf16.msra.mxu0 %v211
    %228 = vmatprep.subr.bf16.mxu0 0
    %229 = vmatpush1.bf16.msra.mxu0 %v210
    %230 = vmatprep.subr.bf16.mxu0 0
    %231 = vmatpush1.bf16.msra.mxu0 %v209
    %232 = vmatprep.subr.bf16.mxu0 0
    %233 = vmatpush1.bf16.msra.mxu0 %v208
    %234 = vmatprep.subr.bf16.mxu0 0
    %235 = vmatpush1.bf16.msra.mxu0 %v207
    %236 = vmatprep.subr.bf16.mxu0 0
    %237 = vmatpush1.bf16.msra.mxu0 %v206
    %238 = vmatprep.subr.bf16.mxu0 0
    %239 = vmatpush2.bf16.msra.mxu0 0
    %240 = vmatprep.subr.bf16.mxu0 0
    %241 = vmatpush2.bf16.msra.mxu0 0
    %242 = vmatprep.subr.bf16.mxu0 0
    %243 = vmatpush2.bf16.msra.mxu0 0
    %244 = vmatprep.subr.bf16.mxu0 0
    %245 = vmatpush2.bf16.msra.mxu0 0
    %246 = vmatprep.subr.bf16.mxu0 0
    %247 = vmatpush2.bf16.msra.mxu0 0
    %248 = vmatprep.subr.bf16.mxu0 0
    %249 = vmatpush2.bf16.msra.mxu0 0
    %250 = vmatprep.subr.bf16.mxu0 0
    %251 = vmatpush2.bf16.msra.mxu0 0
    %252 = vmatprep.subr.bf16.mxu0 0
    %253 = vmatpush2.bf16.msra.mxu0 0
    %254 = vmatprep.mubr.bf16.mxu0 0
    %255 = vmatmul.mubr.bf16.gmra.mxu0 %v158
    %v256 = vpop.f32.mrf.mxu0
    %v257 = vadd.f32 0.0, %v256
    %v258 = vpop.f32.mrf.mxu0
    %v259 = vpop.f32.mrf.mxu0
    %v260 = vadd.f32 0.0, %v259
    %v261 = vpop.f32.mrf.mxu0
    %262 = vmatprep.mubr.bf16.mxu0 0
    %263 = vmatmul.mubr.bf16.gmra.mxu0 %v159
    %v264 = vpop.f32.mrf.mxu0
    %v265 = vadd.f32 0.0, %v264
    %v266 = vpop.f32.mrf.mxu0
    %v267 = vpop.f32.mrf.mxu0
    %v268 = vadd.f32 0.0, %v267
    %v269 = vpop.f32.mrf.mxu0
    %270 = vmatprep.mubr.bf16.mxu0 0
    %271 = vmatmul.mubr.bf16.gmra.mxu0 %v160
    %v272 = vpop.f32.mrf.mxu0
    %v273 = vadd.f32 0.0, %v272
    %v274 = vpop.f32.mrf.mxu0
    %v275 = vpop.f32.mrf.mxu0
    %v276 = vadd.f32 0.0, %v275
    %v277 = vpop.f32.mrf.mxu0
    %278 = vmatprep.mubr.bf16.mxu0 0
    %279 = vmatmul.mubr.bf16.gmra.mxu0 %v161
    %v280 = vpop.f32.mrf.mxu0
    %v281 = vadd.f32 0.0, %v280
    %v282 = vpop.f32.mrf.mxu0
    %v283 = vpop.f32.mrf.mxu0
    %v284 = vadd.f32 0.0, %v283
    %v285 = vpop.f32.mrf.mxu0
    %286 = vmatprep.mubr.bf16.mxu0 0
    %287 = vmatmul.mubr.bf16.gmra.mxu0 %v162
    %v288 = vpop.f32.mrf.mxu0
    %v289 = vadd.f32 0.0, %v288
    %v290 = vpop.f32.mrf.mxu0
    %v291 = vpop.f32.mrf.mxu0
    %v292 = vadd.f32 0.0, %v291
    %v293 = vpop.f32.mrf.mxu0
    %294 = vmatprep.mubr.bf16.mxu0 0
    %295 = vmatmul.mubr.bf16.gmra.mxu0 %v163
    %v296 = vpop.f32.mrf.mxu0
    %v297 = vadd.f32 0.0, %v296
    %v298 = vpop.f32.mrf.mxu0
    %v299 = vpop.f32.mrf.mxu0
    %v300 = vadd.f32 0.0, %v299
    %v301 = vpop.f32.mrf.mxu0
    %302 = vmatprep.mubr.bf16.mxu0 0
    %303 = vmatmul.mubr.bf16.gmra.mxu0 %v164
    %v304 = vpop.f32.mrf.mxu0
    %v305 = vadd.f32 0.0, %v304
    %v306 = vpop.f32.mrf.mxu0
    %v307 = vpop.f32.mrf.mxu0
    %v308 = vadd.f32 0.0, %v307
    %v309 = vpop.f32.mrf.mxu0
    %310 = vmatprep.mubr.bf16.mxu0 0
    %311 = vmatmul.mubr.bf16.gmra.mxu0 %v165
    %v312 = vpop.f32.mrf.mxu0
    %v313 = vadd.f32 0.0, %v312
    %v314 = vpop.f32.mrf.mxu0
    %v315 = vpop.f32.mrf.mxu0
    %v316 = vadd.f32 0.0, %v315
    %v317 = vpop.f32.mrf.mxu0
    %318 = vdwg.mxu0
    %v319 = vadd.f32 %v94, %v257
    %v320 = vadd.f32 %v95, %v260
    %v321 = vadd.f32 %v96, %v265
    %v322 = vadd.f32 %v97, %v268
    %v323 = vadd.f32 %v98, %v273
    %v324 = vadd.f32 %v99, %v276
    %v325 = vadd.f32 %v100, %v281
    %v326 = vadd.f32 %v101, %v284
    %v327 = vadd.f32 %v102, %v289
    %v328 = vadd.f32 %v103, %v292
    %v329 = vadd.f32 %v104, %v297
    %v330 = vadd.f32 %v105, %v300
    %v331 = vadd.f32 %v106, %v305
    %v332 = vadd.f32 %v107, %v308
    %v333 = vadd.f32 %v108, %v313
    %v334 = vadd.f32 %v109, %v316
    %335 = vst [vmem:[#allocation2] sm:$0xff] %v319
    %336 = vst [vmem:[#allocation2 + $0x8] sm:$0xff] %v320
    %337 = vst [vmem:[#allocation2 + $0x10] sm:$0xff] %v321
    %338 = vst [vmem:[#allocation2 + $0x18] sm:$0xff] %v322
    %339 = vst [vmem:[#allocation2 + $0x20] sm:$0xff] %v323
    %340 = vst [vmem:[#allocation2 + $0x28] sm:$0xff] %v324
    %341 = vst [vmem:[#allocation2 + $0x30] sm:$0xff] %v325
    %342 = vst [vmem:[#allocation2 + $0x38] sm:$0xff] %v326
    %343 = vst [vmem:[#allocation2 + $0x40] sm:$0xff] %v327
    %344 = vst [vmem:[#allocation2 + $0x48] sm:$0xff] %v328
    %345 = vst [vmem:[#allocation2 + $0x50] sm:$0xff] %v329
    %346 = vst [vmem:[#allocation2 + $0x58] sm:$0xff] %v330
    %347 = vst [vmem:[#allocation2 + $0x60] sm:$0xff] %v331
    %348 = vst [vmem:[#allocation2 + $0x68] sm:$0xff] %v332
    %349 = vst [vmem:[#allocation2 + $0x70] sm:$0xff] %v333
    %350 = vst [vmem:[#allocation2 + $0x78] sm:$0xff] %v334
    // Predicated region
    $region38: #{tpu_custom_call.1} parent=1 // pred_check
      %p351 = pneg %p53
    $region39: #{tpu_custom_call.1} parent=1 // pred_check_branch
      %353 = sbr.rel (%p351) target = $region41
    $region40: #{tpu_custom_call.1} parent=1 // pred_region
      %v354 = vld [vmem:[#allocation2] sm:$0xff]
      %v355 = vld [vmem:[#allocation2 + $0x8] sm:$0xff]
      %v356 = vld [vmem:[#allocation2 + $0x10] sm:$0xff]
      %v357 = vld [vmem:[#allocation2 + $0x18] sm:$0xff]
      %v358 = vld [vmem:[#allocation2 + $0x20] sm:$0xff]
      %v359 = vld [vmem:[#allocation2 + $0x28] sm:$0xff]
      %v360 = vld [vmem:[#allocation2 + $0x30] sm:$0xff]
      %v361 = vld [vmem:[#allocation2 + $0x38] sm:$0xff]
      %v362 = vld [vmem:[#allocation2 + $0x40] sm:$0xff]
      %v363 = vld [vmem:[#allocation2 + $0x48] sm:$0xff]
      %v364 = vld [vmem:[#allocation2 + $0x50] sm:$0xff]
      %v365 = vld [vmem:[#allocation2 + $0x58] sm:$0xff]
      %v366 = vld [vmem:[#allocation2 + $0x60] sm:$0xff]
      %v367 = vld [vmem:[#allocation2 + $0x68] sm:$0xff]
      %v368 = vld [vmem:[#allocation2 + $0x70] sm:$0xff]
      %v369 = vld [vmem:[#allocation2 + $0x78] sm:$0xff]
      %v370 = vld [vmem:[%s5] sm:$0xff]
      %v371 = vld [vmem:[%s5 + $0x8] sm:$0xff]
      %v372 = vld [vmem:[%s5 + $0x10] sm:$0xff]
      %v373 = vld [vmem:[%s5 + $0x18] sm:$0xff]
      %v374 = vld [vmem:[%s5 + $0x20] sm:$0xff]
      %v375 = vld [vmem:[%s5 + $0x28] sm:$0xff]
      %v376 = vld [vmem:[%s5 + $0x30] sm:$0xff]
      %v377 = vld [vmem:[%s5 + $0x38] sm:$0xff]
      %v378 = vld [vmem:[%s5 + $0x40] sm:$0xff]
      %v379 = vld [vmem:[%s5 + $0x48] sm:$0xff]
      %v380 = vld [vmem:[%s5 + $0x50] sm:$0xff]
      %v381 = vld [vmem:[%s5 + $0x58] sm:$0xff]
      %v382 = vld [vmem:[%s5 + $0x60] sm:$0xff]
      %v383 = vld [vmem:[%s5 + $0x68] sm:$0xff]
      %v384 = vld [vmem:[%s5 + $0x70] sm:$0xff]
      %v385 = vld [vmem:[%s5 + $0x78] sm:$0xff]
      %387 = vset.pattern.permute.xlu0 0
      %388 = vperm.xlu0 %387, %v370
      %v389 = vpop.permute.xlu0 %388
      %392 = vset.pattern.permute.xlu0 0
      %393 = vperm.xlu0 %392, %v371
      %v394 = vpop.permute.xlu0 %393
      %397 = vset.pattern.permute.xlu0 0
      %398 = vperm.xlu0 %397, %v372
      %v399 = vpop.permute.xlu0 %398
      %402 = vset.pattern.permute.xlu0 0
      %403 = vperm.xlu0 %402, %v373
      %v404 = vpop.permute.xlu0 %403
      %407 = vset.pattern.permute.xlu0 0
      %408 = vperm.xlu0 %407, %v374
      %v409 = vpop.permute.xlu0 %408
      %412 = vset.pattern.permute.xlu0 0
      %413 = vperm.xlu0 %412, %v375
      %v414 = vpop.permute.xlu0 %413
      %417 = vset.pattern.permute.xlu0 0
      %418 = vperm.xlu0 %417, %v376
      %v419 = vpop.permute.xlu0 %418
      %422 = vset.pattern.permute.xlu0 0
      %423 = vperm.xlu0 %422, %v377
      %v424 = vpop.permute.xlu0 %423
      %427 = vset.pattern.permute.xlu0 0
      %428 = vperm.xlu0 %427, %v378
      %v429 = vpop.permute.xlu0 %428
      %432 = vset.pattern.permute.xlu0 0
      %433 = vperm.xlu0 %432, %v379
      %v434 = vpop.permute.xlu0 %433
      %437 = vset.pattern.permute.xlu0 0
      %438 = vperm.xlu0 %437, %v380
      %v439 = vpop.permute.xlu0 %438
      %442 = vset.pattern.permute.xlu0 0
      %443 = vperm.xlu0 %442, %v381
      %v444 = vpop.permute.xlu0 %443
      %447 = vset.pattern.permute.xlu0 0
      %448 = vperm.xlu0 %447, %v382
      %v449 = vpop.permute.xlu0 %448
      %452 = vset.pattern.permute.xlu0 0
      %453 = vperm.xlu0 %452, %v383
      %v454 = vpop.permute.xlu0 %453
      %457 = vset.pattern.permute.xlu0 0
      %458 = vperm.xlu0 %457, %v384
      %v459 = vpop.permute.xlu0 %458
      %462 = vset.pattern.permute.xlu0 0
      %463 = vperm.xlu0 %462, %v385
      %v464 = vpop.permute.xlu0 %463
      %v466 = vmul.f32 %v354, %v389
      %v467 = vmul.f32 %v355, %v394
      %v468 = vmul.f32 %v356, %v399
      %v469 = vmul.f32 %v357, %v404
      %v470 = vmul.f32 %v358, %v409
      %v471 = vmul.f32 %v359, %v414
      %v472 = vmul.f32 %v360, %v419
      %v473 = vmul.f32 %v361, %v424
      %v474 = vmul.f32 %v362, %v429
      %v475 = vmul.f32 %v363, %v434
      %v476 = vmul.f32 %v364, %v439
      %v477 = vmul.f32 %v365, %v444
      %v478 = vmul.f32 %v366, %v449
      %v479 = vmul.f32 %v367, %v454
      %v480 = vmul.f32 %v368, %v459
      %v481 = vmul.f32 %v369, %v464
      %v482 = vld [vmem:[#allocation3] sm:$0xf]
      %v483 = vld [vmem:[#allocation3 + $0x4] sm:$0xf]
      %v484 = vld [vmem:[#allocation3 + $0x8] sm:$0xf]
      %v485 = vld [vmem:[#allocation3 + $0xc] sm:$0xf]
      %v486 = vld [vmem:[#allocation3 + $0x10] sm:$0xf]
      %v487 = vld [vmem:[#allocation3 + $0x14] sm:$0xf]
      %v488 = vld [vmem:[#allocation3 + $0x18] sm:$0xf]
      %v489 = vld [vmem:[#allocation3 + $0x1c] sm:$0xf]
      %v490 = vld [vmem:[#allocation3 + $0x20] sm:$0xf]
      %v491 = vld [vmem:[#allocation3 + $0x24] sm:$0xf]
      %v492 = vld [vmem:[#allocation3 + $0x28] sm:$0xf]
      %v493 = vld [vmem:[#allocation3 + $0x2c] sm:$0xf]
      %v494 = vld [vmem:[#allocation3 + $0x30] sm:$0xf]
      %v495 = vld [vmem:[#allocation3 + $0x34] sm:$0xf]
      %v496 = vld [vmem:[#allocation3 + $0x38] sm:$0xf]
      %v497 = vld [vmem:[#allocation3 + $0x3c] sm:$0xf]
      %v498 = vld [vmem:[#allocation6] sm:$0xf]
      %v499 = vld [vmem:[#allocation6 + $0x4] sm:$0xf]
      %v500 = vld [vmem:[#allocation6 + $0x8] sm:$0xf]
      %v501 = vld [vmem:[#allocation6 + $0xc] sm:$0xf]
      %v502 = vld [vmem:[#allocation6 + $0x10] sm:$0xf]
      %v503 = vld [vmem:[#allocation6 + $0x14] sm:$0xf]
      %v504 = vld [vmem:[#allocation6 + $0x18] sm:$0xf]
      %v505 = vld [vmem:[#allocation6 + $0x1c] sm:$0xf]
      %v506 = vld [vmem:[#allocation6 + $0x20] sm:$0xf]
      %v507 = vld [vmem:[#allocation6 + $0x24] sm:$0xf]
      %v508 = vld [vmem:[#allocation6 + $0x28] sm:$0xf]
      %v509 = vld [vmem:[#allocation6 + $0x2c] sm:$0xf]
      %v510 = vld [vmem:[#allocation6 + $0x30] sm:$0xf]
      %v511 = vld [vmem:[#allocation6 + $0x34] sm:$0xf]
      %v512 = vld [vmem:[#allocation6 + $0x38] sm:$0xf]
      %v513 = vld [vmem:[#allocation6 + $0x3c] sm:$0xf]
      %v514 = vld [vmem:[%s4] sm:$0x1]
      %v516 = vlaneseq
      %v517 = vshrl.u32 %v516, 7
      %v518 = vsub.s32 0, %v517
      %v519 = vrot.slane %v514, %v518
      %v537 = vunpack.c.l.b16 %v482
      %v538 = vunpack.c.l.b16 %v483
      %v539 = vunpack.c.l.b16 %v484
      %v540 = vunpack.c.l.b16 %v485
      %v541 = vunpack.c.l.b16 %v486
      %v542 = vunpack.c.l.b16 %v487
      %v543 = vunpack.c.l.b16 %v488
      %v544 = vunpack.c.l.b16 %v489
      %v545 = vunpack.c.l.b16 %v490
      %v546 = vunpack.c.l.b16 %v491
      %v547 = vunpack.c.l.b16 %v492
      %v548 = vunpack.c.l.b16 %v493
      %v549 = vunpack.c.l.b16 %v494
      %v550 = vunpack.c.l.b16 %v495
      %v551 = vunpack.c.l.b16 %v496
      %v552 = vunpack.c.l.b16 %v497
      %v553 = vpack.c.b16 %v538, %v537
      %v554 = vpack.c.b16 %v540, %v539
      %v555 = vpack.c.b16 %v542, %v541
      %v556 = vpack.c.b16 %v544, %v543
      %v557 = vpack.c.b16 %v546, %v545
      %v558 = vpack.c.b16 %v548, %v547
      %v559 = vpack.c.b16 %v550, %v549
      %v560 = vpack.c.b16 %v552, %v551
      %v585 = vunpack.c.l.b16 %v498
      %v586 = vunpack.c.l.b16 %v499
      %v587 = vunpack.c.l.b16 %v500
      %v588 = vunpack.c.l.b16 %v501
      %v589 = vunpack.c.l.b16 %v502
      %v590 = vunpack.c.l.b16 %v503
      %v591 = vunpack.c.l.b16 %v504
      %v592 = vunpack.c.l.b16 %v505
      %v593 = vunpack.c.l.b16 %v506
      %v594 = vunpack.c.l.b16 %v507
      %v595 = vunpack.c.l.b16 %v508
      %v596 = vunpack.c.l.b16 %v509
      %v597 = vunpack.c.l.b16 %v510
      %v598 = vunpack.c.l.b16 %v511
      %v599 = vunpack.c.l.b16 %v512
      %v600 = vunpack.c.l.b16 %v513
      %v601 = vpack.c.b16 %v586, %v585
      %v602 = vpack.c.b16 %v588, %v587
      %v603 = vpack.c.b16 %v590, %v589
      %v604 = vpack.c.b16 %v592, %v591
      %v605 = vpack.c.b16 %v594, %v593
      %v606 = vpack.c.b16 %v596, %v595
      %v607 = vpack.c.b16 %v598, %v597
      %v608 = vpack.c.b16 %v600, %v599
      %617 = vmatprep.subr.bf16.mxu0 0
      %618 = vmatpush1.bf16.msra.mxu0 %v608
      %619 = vmatprep.subr.bf16.mxu0 0
      %620 = vmatpush1.bf16.msra.mxu0 %v607
      %621 = vmatprep.subr.bf16.mxu0 0
      %622 = vmatpush1.bf16.msra.mxu0 %v606
      %623 = vmatprep.subr.bf16.mxu0 0
      %624 = vmatpush1.bf16.msra.mxu0 %v605
      %625 = vmatprep.subr.bf16.mxu0 0
      %626 = vmatpush1.bf16.msra.mxu0 %v604
      %627 = vmatprep.subr.bf16.mxu0 0
      %628 = vmatpush1.bf16.msra.mxu0 %v603
      %629 = vmatprep.subr.bf16.mxu0 0
      %630 = vmatpush1.bf16.msra.mxu0 %v602
      %631 = vmatprep.subr.bf16.mxu0 0
      %632 = vmatpush1.bf16.msra.mxu0 %v601
      %633 = vmatprep.subr.bf16.mxu0 0
      %634 = vmatpush2.bf16.msra.mxu0 0
      %635 = vmatprep.subr.bf16.mxu0 0
      %636 = vmatpush2.bf16.msra.mxu0 0
      %637 = vmatprep.subr.bf16.mxu0 0
      %638 = vmatpush2.bf16.msra.mxu0 0
      %639 = vmatprep.subr.bf16.mxu0 0
      %640 = vmatpush2.bf16.msra.mxu0 0
      %641 = vmatprep.subr.bf16.mxu0 0
      %642 = vmatpush2.bf16.msra.mxu0 0
      %643 = vmatprep.subr.bf16.mxu0 0
      %644 = vmatpush2.bf16.msra.mxu0 0
      %645 = vmatprep.subr.bf16.mxu0 0
      %646 = vmatpush2.bf16.msra.mxu0 0
      %647 = vmatprep.subr.bf16.mxu0 0
      %648 = vmatpush2.bf16.msra.mxu0 0
      %649 = vmatprep.mubr.bf16.mxu0 0
      %650 = vmatmul.mubr.bf16.gmra.mxu0 %v553
      %v651 = vpop.f32.mrf.mxu0
      %v652 = vadd.f32 %v519, %v651
      %v653 = vpop.f32.mrf.mxu0
      %v654 = vpop.f32.mrf.mxu0
      %v655 = vadd.f32 %v519, %v654
      %v656 = vpop.f32.mrf.mxu0
      %657 = vmatprep.mubr.bf16.mxu0 0
      %658 = vmatmul.mubr.bf16.gmra.mxu0 %v554
      %v659 = vpop.f32.mrf.mxu0
      %v660 = vadd.f32 %v519, %v659
      %v661 = vpop.f32.mrf.mxu0
      %v662 = vpop.f32.mrf.mxu0
      %v663 = vadd.f32 %v519, %v662
      %v664 = vpop.f32.mrf.mxu0
      %665 = vmatprep.mubr.bf16.mxu0 0
      %666 = vmatmul.mubr.bf16.gmra.mxu0 %v555
      %v667 = vpop.f32.mrf.mxu0
      %v668 = vadd.f32 %v519, %v667
      %v669 = vpop.f32.mrf.mxu0
      %v670 = vpop.f32.mrf.mxu0
      %v671 = vadd.f32 %v519, %v670
      %v672 = vpop.f32.mrf.mxu0
      %673 = vmatprep.mubr.bf16.mxu0 0
      %674 = vmatmul.mubr.bf16.gmra.mxu0 %v556
      %v675 = vpop.f32.mrf.mxu0
      %v676 = vadd.f32 %v519, %v675
      %v677 = vpop.f32.mrf.mxu0
      %v678 = vpop.f32.mrf.mxu0
      %v679 = vadd.f32 %v519, %v678
      %v680 = vpop.f32.mrf.mxu0
      %681 = vmatprep.mubr.bf16.mxu0 0
      %682 = vmatmul.mubr.bf16.gmra.mxu0 %v557
      %v683 = vpop.f32.mrf.mxu0
      %v684 = vadd.f32 %v519, %v683
      %v685 = vpop.f32.mrf.mxu0
      %v686 = vpop.f32.mrf.mxu0
      %v687 = vadd.f32 %v519, %v686
      %v688 = vpop.f32.mrf.mxu0
      %689 = vmatprep.mubr.bf16.mxu0 0
      %690 = vmatmul.mubr.bf16.gmra.mxu0 %v558
      %v691 = vpop.f32.mrf.mxu0
      %v692 = vadd.f32 %v519, %v691
      %v693 = vpop.f32.mrf.mxu0
      %v694 = vpop.f32.mrf.mxu0
      %v695 = vadd.f32 %v519, %v694
      %v696 = vpop.f32.mrf.mxu0
      %697 = vmatprep.mubr.bf16.mxu0 0
      %698 = vmatmul.mubr.bf16.gmra.mxu0 %v559
      %v699 = vpop.f32.mrf.mxu0
      %v700 = vadd.f32 %v519, %v699
      %v701 = vpop.f32.mrf.mxu0
      %v702 = vpop.f32.mrf.mxu0
      %v703 = vadd.f32 %v519, %v702
      %v704 = vpop.f32.mrf.mxu0
      %705 = vmatprep.mubr.bf16.mxu0 0
      %706 = vmatmul.mubr.bf16.gmra.mxu0 %v560
      %v707 = vpop.f32.mrf.mxu0
      %v708 = vadd.f32 %v519, %v707
      %v709 = vpop.f32.mrf.mxu0
      %v710 = vpop.f32.mrf.mxu0
      %v711 = vadd.f32 %v519, %v710
      %v712 = vpop.f32.mrf.mxu0
      %713 = vdwg.mxu0
      %v714 = vadd.f32 %v652, %v466
      %v715 = vadd.f32 %v655, %v467
      %v716 = vadd.f32 %v660, %v468
      %v717 = vadd.f32 %v663, %v469
      %v718 = vadd.f32 %v668, %v470
      %v719 = vadd.f32 %v671, %v471
      %v720 = vadd.f32 %v676, %v472
      %v721 = vadd.f32 %v679, %v473
      %v722 = vadd.f32 %v684, %v474
      %v723 = vadd.f32 %v687, %v475
      %v724 = vadd.f32 %v692, %v476
      %v725 = vadd.f32 %v695, %v477
      %v726 = vadd.f32 %v700, %v478
      %v727 = vadd.f32 %v703, %v479
      %v728 = vadd.f32 %v708, %v480
      %v729 = vadd.f32 %v711, %v481
      %v730 = vmax.f32 %v714, 0.0
      %v731 = vmax.f32 %v715, 0.0
      %v732 = vmax.f32 %v716, 0.0
      %v733 = vmax.f32 %v717, 0.0
      %v734 = vmax.f32 %v718, 0.0
      %v735 = vmax.f32 %v719, 0.0
      %v736 = vmax.f32 %v720, 0.0
      %v737 = vmax.f32 %v721, 0.0
      %v738 = vmax.f32 %v722, 0.0
      %v739 = vmax.f32 %v723, 0.0
      %v740 = vmax.f32 %v724, 0.0
      %v741 = vmax.f32 %v725, 0.0
      %v742 = vmax.f32 %v726, 0.0
      %v743 = vmax.f32 %v727, 0.0
      %v744 = vmax.f32 %v728, 0.0
      %v745 = vmax.f32 %v729, 0.0
      %v746 = vlaneseq
      %v747 = vand.u32 %v746, 127
      %vm748 = vcmp.lt.s32.totalorder %v747, 32
      %v749 = vmul.f32 %v730, %v730
      %v750 = vmul.f32 %v731, %v731
      %v751 = vmul.f32 %v732, %v732
      %v752 = vmul.f32 %v733, %v733
      %v753 = vmul.f32 %v734, %v734
      %v754 = vmul.f32 %v735, %v735
      %v755 = vmul.f32 %v736, %v736
      %v756 = vmul.f32 %v737, %v737
      %v757 = vmul.f32 %v738, %v738
      %v758 = vmul.f32 %v739, %v739
      %v759 = vmul.f32 %v740, %v740
      %v760 = vmul.f32 %v741, %v741
      %v761 = vmul.f32 %v742, %v742
      %v762 = vmul.f32 %v743, %v743
      %v763 = vmul.f32 %v744, %v744
      %v764 = vmul.f32 %v745, %v745
      %765 = vadd.xlane.f32.xlu0 %v749
      %v766 = vpop.xlane.xlu0 %765
      %767 = vadd.xlane.f32.xlu0 %v750
      %v768 = vpop.xlane.xlu0 %767
      %769 = vadd.xlane.f32.xlu0 %v751
      %v770 = vpop.xlane.xlu0 %769
      %771 = vadd.xlane.f32.xlu0 %v752
      %v772 = vpop.xlane.xlu0 %771
      %773 = vadd.xlane.f32.xlu0 %v753
      %v774 = vpop.xlane.xlu0 %773
      %775 = vadd.xlane.f32.xlu0 %v754
      %v776 = vpop.xlane.xlu0 %775
      %777 = vadd.xlane.f32.xlu0 %v755
      %v778 = vpop.xlane.xlu0 %777
      %779 = vadd.xlane.f32.xlu0 %v756
      %v780 = vpop.xlane.xlu0 %779
      %781 = vadd.xlane.f32.xlu0 %v757
      %v782 = vpop.xlane.xlu0 %781
      %783 = vadd.xlane.f32.xlu0 %v758
      %v784 = vpop.xlane.xlu0 %783
      %785 = vadd.xlane.f32.xlu0 %v759
      %v786 = vpop.xlane.xlu0 %785
      %787 = vadd.xlane.f32.xlu0 %v760
      %v788 = vpop.xlane.xlu0 %787
      %789 = vadd.xlane.f32.xlu0 %v761
      %v790 = vpop.xlane.xlu0 %789
      %791 = vadd.xlane.f32.xlu0 %v762
      %v792 = vpop.xlane.xlu0 %791
      %793 = vadd.xlane.f32.xlu0 %v763
      %v794 = vpop.xlane.xlu0 %793
      %795 = vadd.xlane.f32.xlu0 %v764
      %v796 = vpop.xlane.xlu0 %795
      %v797 = vsub.f32 %v766, 1.0
      %v798 = vsub.f32 %v768, 1.0
      %v799 = vsub.f32 %v770, 1.0
      %v800 = vsub.f32 %v772, 1.0
      %v801 = vsub.f32 %v774, 1.0
      %v802 = vsub.f32 %v776, 1.0
      %v803 = vsub.f32 %v778, 1.0
      %v804 = vsub.f32 %v780, 1.0
      %v805 = vsub.f32 %v782, 1.0
      %v806 = vsub.f32 %v784, 1.0
      %v807 = vsub.f32 %v786, 1.0
      %v808 = vsub.f32 %v788, 1.0
      %v809 = vsub.f32 %v790, 1.0
      %v810 = vsub.f32 %v792, 1.0
      %v811 = vsub.f32 %v794, 1.0
      %v812 = vsub.f32 %v796, 1.0
      %v813 = vmax.f32 %v797, 1e-08
      %v814 = vmax.f32 %v798, 1e-08
      %v815 = vmax.f32 %v799, 1e-08
      %v816 = vmax.f32 %v800, 1e-08
      %v817 = vmax.f32 %v801, 1e-08
      %v818 = vmax.f32 %v802, 1e-08
      %v819 = vmax.f32 %v803, 1e-08
      %v820 = vmax.f32 %v804, 1e-08
      %v821 = vmax.f32 %v805, 1e-08
      %v822 = vmax.f32 %v806, 1e-08
      %v823 = vmax.f32 %v807, 1e-08
      %v824 = vmax.f32 %v808, 1e-08
      %v825 = vmax.f32 %v809, 1e-08
      %v826 = vmax.f32 %v810, 1e-08
      %v827 = vmax.f32 %v811, 1e-08
      %v828 = vmax.f32 %v812, 1e-08
      %v829 = vrsqrt.pop %v813
      %v830 = vrsqrt.pop %v814
      %v831 = vrsqrt.pop %v815
      %v832 = vrsqrt.pop %v816
      %v833 = vrsqrt.pop %v817
      %v834 = vrsqrt.pop %v818
      %v835 = vrsqrt.pop %v819
      %v836 = vrsqrt.pop %v820
      %v837 = vrsqrt.pop %v821
      %v838 = vrsqrt.pop %v822
      %v839 = vrsqrt.pop %v823
      %v840 = vrsqrt.pop %v824
      %v841 = vrsqrt.pop %v825
      %v842 = vrsqrt.pop %v826
      %v843 = vrsqrt.pop %v827
      %v844 = vrsqrt.pop %v828
      %v845 = vmul.f32 %v730, %v829
      %v846 = vmul.f32 %v731, %v830
      %v847 = vmul.f32 %v732, %v831
      %v848 = vmul.f32 %v733, %v832
      %v849 = vmul.f32 %v734, %v833
      %v850 = vmul.f32 %v735, %v834
      %v851 = vmul.f32 %v736, %v835
      %v852 = vmul.f32 %v737, %v836
      %v853 = vmul.f32 %v738, %v837
      %v854 = vmul.f32 %v739, %v838
      %v855 = vmul.f32 %v740, %v839
      %v856 = vmul.f32 %v741, %v840
      %v857 = vmul.f32 %v742, %v841
      %v858 = vmul.f32 %v743, %v842
      %v859 = vmul.f32 %v744, %v843
      %v860 = vmul.f32 %v745, %v844
      %v861 = vand.u32 2147483647, %v845
      %v862 = vand.u32 2147483647, %v846
      %v863 = vand.u32 2147483647, %v847
      %v864 = vand.u32 2147483647, %v848
      %v865 = vand.u32 2147483647, %v849
      %v866 = vand.u32 2147483647, %v850
      %v867 = vand.u32 2147483647, %v851
      %v868 = vand.u32 2147483647, %v852
      %v869 = vand.u32 2147483647, %v853
      %v870 = vand.u32 2147483647, %v854
      %v871 = vand.u32 2147483647, %v855
      %v872 = vand.u32 2147483647, %v856
      %v873 = vand.u32 2147483647, %v857
      %v874 = vand.u32 2147483647, %v858
      %v875 = vand.u32 2147483647, %v859
      %v876 = vand.u32 2147483647, %v860
      %877 = vadd.xlane.f32.xlu0 %v861
      %v878 = vpop.xlane.xlu0 %877
      %879 = vadd.xlane.f32.xlu0 %v862
      %v880 = vpop.xlane.xlu0 %879
      %881 = vadd.xlane.f32.xlu0 %v863
      %v882 = vpop.xlane.xlu0 %881
      %883 = vadd.xlane.f32.xlu0 %v864
      %v884 = vpop.xlane.xlu0 %883
      %885 = vadd.xlane.f32.xlu0 %v865
      %v886 = vpop.xlane.xlu0 %885
      %887 = vadd.xlane.f32.xlu0 %v866
      %v888 = vpop.xlane.xlu0 %887
      %889 = vadd.xlane.f32.xlu0 %v867
      %v890 = vpop.xlane.xlu0 %889
      %891 = vadd.xlane.f32.xlu0 %v868
      %v892 = vpop.xlane.xlu0 %891
      %893 = vadd.xlane.f32.xlu0 %v869
      %v894 = vpop.xlane.xlu0 %893
      %895 = vadd.xlane.f32.xlu0 %v870
      %v896 = vpop.xlane.xlu0 %895
      %897 = vadd.xlane.f32.xlu0 %v871
      %v898 = vpop.xlane.xlu0 %897
      %899 = vadd.xlane.f32.xlu0 %v872
      %v900 = vpop.xlane.xlu0 %899
      %901 = vadd.xlane.f32.xlu0 %v873
      %v902 = vpop.xlane.xlu0 %901
      %903 = vadd.xlane.f32.xlu0 %v874
      %v904 = vpop.xlane.xlu0 %903
      %905 = vadd.xlane.f32.xlu0 %v875
      %v906 = vpop.xlane.xlu0 %905
      %907 = vadd.xlane.f32.xlu0 %v876
      %v908 = vpop.xlane.xlu0 %907
      %vm909 = vcmp.eq.f32.partialorder %v878, 0.0
      %vm910 = vcmp.eq.f32.partialorder %v880, 0.0
      %vm911 = vcmp.eq.f32.partialorder %v882, 0.0
      %vm912 = vcmp.eq.f32.partialorder %v884, 0.0
      %vm913 = vcmp.eq.f32.partialorder %v886, 0.0
      %vm914 = vcmp.eq.f32.partialorder %v888, 0.0
      %vm915 = vcmp.eq.f32.partialorder %v890, 0.0
      %vm916 = vcmp.eq.f32.partialorder %v892, 0.0
      %vm917 = vcmp.eq.f32.partialorder %v894, 0.0
      %vm918 = vcmp.eq.f32.partialorder %v896, 0.0
      %vm919 = vcmp.eq.f32.partialorder %v898, 0.0
      %vm920 = vcmp.eq.f32.partialorder %v900, 0.0
      %vm921 = vcmp.eq.f32.partialorder %v902, 0.0
      %vm922 = vcmp.eq.f32.partialorder %v904, 0.0
      %vm923 = vcmp.eq.f32.partialorder %v906, 0.0
      %vm924 = vcmp.eq.f32.partialorder %v908, 0.0
      %v925 = vsel %vm909, 1, 0
      %v926 = vsel %vm910, 1, 0
      %v927 = vsel %vm911, 1, 0
      %v928 = vsel %vm912, 1, 0
      %v929 = vsel %vm913, 1, 0
      %v930 = vsel %vm914, 1, 0
      %v931 = vsel %vm915, 1, 0
      %v932 = vsel %vm916, 1, 0
      %v933 = vsel %vm917, 1, 0
      %v934 = vsel %vm918, 1, 0
      %v935 = vsel %vm919, 1, 0
      %v936 = vsel %vm920, 1, 0
      %v937 = vsel %vm921, 1, 0
      %v938 = vsel %vm922, 1, 0
      %v939 = vsel %vm923, 1, 0
      %v940 = vsel %vm924, 1, 0
      %vm941 = vcmp.eq.s32.totalorder %v925, 1
      %vm942 = vcmp.eq.s32.totalorder %v926, 1
      %vm943 = vcmp.eq.s32.totalorder %v927, 1
      %vm944 = vcmp.eq.s32.totalorder %v928, 1
      %vm945 = vcmp.eq.s32.totalorder %v929, 1
      %vm946 = vcmp.eq.s32.totalorder %v930, 1
      %vm947 = vcmp.eq.s32.totalorder %v931, 1
      %vm948 = vcmp.eq.s32.totalorder %v932, 1
      %vm949 = vcmp.eq.s32.totalorder %v933, 1
      %vm950 = vcmp.eq.s32.totalorder %v934, 1
      %vm951 = vcmp.eq.s32.totalorder %v935, 1
      %vm952 = vcmp.eq.s32.totalorder %v936, 1
      %vm953 = vcmp.eq.s32.totalorder %v937, 1
      %vm954 = vcmp.eq.s32.totalorder %v938, 1
      %vm955 = vcmp.eq.s32.totalorder %v939, 1
      %vm956 = vcmp.eq.s32.totalorder %v940, 1
      %v957 = vsel %vm748, 1, 0
      %vm958 = vcmp.eq.s32.totalorder %v957, 1
      %vm959 = vmand %vm941, %vm958
      %vm960 = vmand %vm942, %vm958
      %vm961 = vmand %vm943, %vm958
      %vm962 = vmand %vm944, %vm958
      %vm963 = vmand %vm945, %vm958
      %vm964 = vmand %vm946, %vm958
      %vm965 = vmand %vm947, %vm958
      %vm966 = vmand %vm948, %vm958
      %vm967 = vmand %vm949, %vm958
      %vm968 = vmand %vm950, %vm958
      %vm969 = vmand %vm951, %vm958
      %vm970 = vmand %vm952, %vm958
      %vm971 = vmand %vm953, %vm958
      %vm972 = vmand %vm954, %vm958
      %vm973 = vmand %vm955, %vm958
      %vm974 = vmand %vm956, %vm958
      %v975 = vsel %vm959, 1.0, %v845
      %v976 = vsel %vm960, 1.0, %v846
      %v977 = vsel %vm961, 1.0, %v847
      %v978 = vsel %vm962, 1.0, %v848
      %v979 = vsel %vm963, 1.0, %v849
      %v980 = vsel %vm964, 1.0, %v850
      %v981 = vsel %vm965, 1.0, %v851
      %v982 = vsel %vm966, 1.0, %v852
      %v983 = vsel %vm967, 1.0, %v853
      %v984 = vsel %vm968, 1.0, %v854
      %v985 = vsel %vm969, 1.0, %v855
      %v986 = vsel %vm970, 1.0, %v856
      %v987 = vsel %vm971, 1.0, %v857
      %v988 = vsel %vm972, 1.0, %v858
      %v989 = vsel %vm973, 1.0, %v859
      %v990 = vsel %vm974, 1.0, %v860
      %v991 = vmul.f32 %v975, %v975
      %v992 = vmul.f32 %v976, %v976
      %v993 = vmul.f32 %v977, %v977
      %v994 = vmul.f32 %v978, %v978
      %v995 = vmul.f32 %v979, %v979
      %v996 = vmul.f32 %v980, %v980
      %v997 = vmul.f32 %v981, %v981
      %v998 = vmul.f32 %v982, %v982
      %v999 = vmul.f32 %v983, %v983
      %v1000 = vmul.f32 %v984, %v984
      %v1001 = vmul.f32 %v985, %v985
      %v1002 = vmul.f32 %v986, %v986
      %v1003 = vmul.f32 %v987, %v987
      %v1004 = vmul.f32 %v988, %v988
      %v1005 = vmul.f32 %v989, %v989
      %v1006 = vmul.f32 %v990, %v990
      %1007 = vadd.xlane.f32.xlu0 %v991
      %v1008 = vpop.xlane.xlu0 %1007
      %1009 = vadd.xlane.f32.xlu0 %v992
      %v1010 = vpop.xlane.xlu0 %1009
      %1011 = vadd.xlane.f32.xlu0 %v993
      %v1012 = vpop.xlane.xlu0 %1011
      %1013 = vadd.xlane.f32.xlu0 %v994
      %v1014 = vpop.xlane.xlu0 %1013
      %1015 = vadd.xlane.f32.xlu0 %v995
      %v1016 = vpop.xlane.xlu0 %1015
      %1017 = vadd.xlane.f32.xlu0 %v996
      %v1018 = vpop.xlane.xlu0 %1017
      %1019 = vadd.xlane.f32.xlu0 %v997
      %v1020 = vpop.xlane.xlu0 %1019
      %1021 = vadd.xlane.f32.xlu0 %v998
      %v1022 = vpop.xlane.xlu0 %1021
      %1023 = vadd.xlane.f32.xlu0 %v999
      %v1024 = vpop.xlane.xlu0 %1023
      %1025 = vadd.xlane.f32.xlu0 %v1000
      %v1026 = vpop.xlane.xlu0 %1025
      %1027 = vadd.xlane.f32.xlu0 %v1001
      %v1028 = vpop.xlane.xlu0 %1027
      %1029 = vadd.xlane.f32.xlu0 %v1002
      %v1030 = vpop.xlane.xlu0 %1029
      %1031 = vadd.xlane.f32.xlu0 %v1003
      %v1032 = vpop.xlane.xlu0 %1031
      %1033 = vadd.xlane.f32.xlu0 %v1004
      %v1034 = vpop.xlane.xlu0 %1033
      %1035 = vadd.xlane.f32.xlu0 %v1005
      %v1036 = vpop.xlane.xlu0 %1035
      %1037 = vadd.xlane.f32.xlu0 %v1006
      %v1038 = vpop.xlane.xlu0 %1037
      %v1039 = vmax.f32 %v1008, 1e-16
      %v1040 = vmax.f32 %v1010, 1e-16
      %v1041 = vmax.f32 %v1012, 1e-16
      %v1042 = vmax.f32 %v1014, 1e-16
      %v1043 = vmax.f32 %v1016, 1e-16
      %v1044 = vmax.f32 %v1018, 1e-16
      %v1045 = vmax.f32 %v1020, 1e-16
      %v1046 = vmax.f32 %v1022, 1e-16
      %v1047 = vmax.f32 %v1024, 1e-16
      %v1048 = vmax.f32 %v1026, 1e-16
      %v1049 = vmax.f32 %v1028, 1e-16
      %v1050 = vmax.f32 %v1030, 1e-16
      %v1051 = vmax.f32 %v1032, 1e-16
      %v1052 = vmax.f32 %v1034, 1e-16
      %v1053 = vmax.f32 %v1036, 1e-16
      %v1054 = vmax.f32 %v1038, 1e-16
      %v1055 = vrsqrt.pop %v1039
      %v1056 = vrsqrt.pop %v1040
      %v1057 = vrsqrt.pop %v1041
      %v1058 = vrsqrt.pop %v1042
      %v1059 = vrsqrt.pop %v1043
      %v1060 = vrsqrt.pop %v1044
      %v1061 = vrsqrt.pop %v1045
      %v1062 = vrsqrt.pop %v1046
      %v1063 = vrsqrt.pop %v1047
      %v1064 = vrsqrt.pop %v1048
      %v1065 = vrsqrt.pop %v1049
      %v1066 = vrsqrt.pop %v1050
      %v1067 = vrsqrt.pop %v1051
      %v1068 = vrsqrt.pop %v1052
      %v1069 = vrsqrt.pop %v1053
      %v1070 = vrsqrt.pop %v1054
      %v1071 = vmul.f32 %v975, %v1055
      %v1072 = vmul.f32 %v976, %v1056
      %v1073 = vmul.f32 %v977, %v1057
      %v1074 = vmul.f32 %v978, %v1058
      %v1075 = vmul.f32 %v979, %v1059
      %v1076 = vmul.f32 %v980, %v1060
      %v1077 = vmul.f32 %v981, %v1061
      %v1078 = vmul.f32 %v982, %v1062
      %v1079 = vmul.f32 %v983, %v1063
      %v1080 = vmul.f32 %v984, %v1064
      %v1081 = vmul.f32 %v985, %v1065
      %v1082 = vmul.f32 %v986, %v1066
      %v1083 = vmul.f32 %v987, %v1067
      %v1084 = vmul.f32 %v988, %v1068
      %v1085 = vmul.f32 %v989, %v1069
      %v1086 = vmul.f32 %v990, %v1070
      %v1087 = vmul.f32 %v1071, %v1071
      %v1088 = vmul.f32 %v1072, %v1072
      %v1089 = vmul.f32 %v1073, %v1073
      %v1090 = vmul.f32 %v1074, %v1074
      %v1091 = vmul.f32 %v1075, %v1075
      %v1092 = vmul.f32 %v1076, %v1076
      %v1093 = vmul.f32 %v1077, %v1077
      %v1094 = vmul.f32 %v1078, %v1078
      %v1095 = vmul.f32 %v1079, %v1079
      %v1096 = vmul.f32 %v1080, %v1080
      %v1097 = vmul.f32 %v1081, %v1081
      %v1098 = vmul.f32 %v1082, %v1082
      %v1099 = vmul.f32 %v1083, %v1083
      %v1100 = vmul.f32 %v1084, %v1084
      %v1101 = vmul.f32 %v1085, %v1085
      %v1102 = vmul.f32 %v1086, %v1086
      %1103 = vadd.xlane.f32.xlu0 %v1087
      %v1104 = vpop.xlane.xlu0 %1103
      %1105 = vadd.xlane.f32.xlu0 %v1088
      %v1106 = vpop.xlane.xlu0 %1105
      %1107 = vadd.xlane.f32.xlu0 %v1089
      %v1108 = vpop.xlane.xlu0 %1107
      %1109 = vadd.xlane.f32.xlu0 %v1090
      %v1110 = vpop.xlane.xlu0 %1109
      %1111 = vadd.xlane.f32.xlu0 %v1091
      %v1112 = vpop.xlane.xlu0 %1111
      %1113 = vadd.xlane.f32.xlu0 %v1092
      %v1114 = vpop.xlane.xlu0 %1113
      %1115 = vadd.xlane.f32.xlu0 %v1093
      %v1116 = vpop.xlane.xlu0 %1115
      %1117 = vadd.xlane.f32.xlu0 %v1094
      %v1118 = vpop.xlane.xlu0 %1117
      %1119 = vadd.xlane.f32.xlu0 %v1095
      %v1120 = vpop.xlane.xlu0 %1119
      %1121 = vadd.xlane.f32.xlu0 %v1096
      %v1122 = vpop.xlane.xlu0 %1121
      %1123 = vadd.xlane.f32.xlu0 %v1097
      %v1124 = vpop.xlane.xlu0 %1123
      %1125 = vadd.xlane.f32.xlu0 %v1098
      %v1126 = vpop.xlane.xlu0 %1125
      %1127 = vadd.xlane.f32.xlu0 %v1099
      %v1128 = vpop.xlane.xlu0 %1127
      %1129 = vadd.xlane.f32.xlu0 %v1100
      %v1130 = vpop.xlane.xlu0 %1129
      %1131 = vadd.xlane.f32.xlu0 %v1101
      %v1132 = vpop.xlane.xlu0 %1131
      %1133 = vadd.xlane.f32.xlu0 %v1102
      %v1134 = vpop.xlane.xlu0 %1133
      %v1135 = vmax.f32 %v1104, 1e-16
      %v1136 = vmax.f32 %v1106, 1e-16
      %v1137 = vmax.f32 %v1108, 1e-16
      %v1138 = vmax.f32 %v1110, 1e-16
      %v1139 = vmax.f32 %v1112, 1e-16
      %v1140 = vmax.f32 %v1114, 1e-16
      %v1141 = vmax.f32 %v1116, 1e-16
      %v1142 = vmax.f32 %v1118, 1e-16
      %v1143 = vmax.f32 %v1120, 1e-16
      %v1144 = vmax.f32 %v1122, 1e-16
      %v1145 = vmax.f32 %v1124, 1e-16
      %v1146 = vmax.f32 %v1126, 1e-16
      %v1147 = vmax.f32 %v1128, 1e-16
      %v1148 = vmax.f32 %v1130, 1e-16
      %v1149 = vmax.f32 %v1132, 1e-16
      %v1150 = vmax.f32 %v1134, 1e-16
      %v1151 = vrsqrt.pop %v1135
      %v1152 = vrsqrt.pop %v1136
      %v1153 = vrsqrt.pop %v1137
      %v1154 = vrsqrt.pop %v1138
      %v1155 = vrsqrt.pop %v1139
      %v1156 = vrsqrt.pop %v1140
      %v1157 = vrsqrt.pop %v1141
      %v1158 = vrsqrt.pop %v1142
      %v1159 = vrsqrt.pop %v1143
      %v1160 = vrsqrt.pop %v1144
      %v1161 = vrsqrt.pop %v1145
      %v1162 = vrsqrt.pop %v1146
      %v1163 = vrsqrt.pop %v1147
      %v1164 = vrsqrt.pop %v1148
      %v1165 = vrsqrt.pop %v1149
      %v1166 = vrsqrt.pop %v1150
      %v1167 = vmul.f32 %v1071, %v1151
      %v1168 = vmul.f32 %v1072, %v1152
      %v1169 = vmul.f32 %v1073, %v1153
      %v1170 = vmul.f32 %v1074, %v1154
      %v1171 = vmul.f32 %v1075, %v1155
      %v1172 = vmul.f32 %v1076, %v1156
      %v1173 = vmul.f32 %v1077, %v1157
      %v1174 = vmul.f32 %v1078, %v1158
      %v1175 = vmul.f32 %v1079, %v1159
      %v1176 = vmul.f32 %v1080, %v1160
      %v1177 = vmul.f32 %v1081, %v1161
      %v1178 = vmul.f32 %v1082, %v1162
      %v1179 = vmul.f32 %v1083, %v1163
      %v1180 = vmul.f32 %v1084, %v1164
      %v1181 = vmul.f32 %v1085, %v1165
      %v1182 = vmul.f32 %v1086, %v1166
      %vm1183 = vcmp.eq.s32.totalorder %v747, 32
      %v1184 = vsel %vm1183, 1, 0
      %v1185 = vcvt.s32.f32 %v1184
      %v1186 = vadd.f32 %v1167, %v1185
      %v1187 = vadd.f32 %v1168, %v1185
      %v1188 = vadd.f32 %v1169, %v1185
      %v1189 = vadd.f32 %v1170, %v1185
      %v1190 = vadd.f32 %v1171, %v1185
      %v1191 = vadd.f32 %v1172, %v1185
      %v1192 = vadd.f32 %v1173, %v1185
      %v1193 = vadd.f32 %v1174, %v1185
      %v1194 = vadd.f32 %v1175, %v1185
      %v1195 = vadd.f32 %v1176, %v1185
      %v1196 = vadd.f32 %v1177, %v1185
      %v1197 = vadd.f32 %v1178, %v1185
      %v1198 = vadd.f32 %v1179, %v1185
      %v1199 = vadd.f32 %v1180, %v1185
      %v1200 = vadd.f32 %v1181, %v1185
      %v1201 = vadd.f32 %v1182, %v1185
      %v1202 = vpack.c.bf16 %v1187, %v1186
      %v1203 = vpack.c.bf16 %v1189, %v1188
      %v1204 = vpack.c.bf16 %v1191, %v1190
      %v1205 = vpack.c.bf16 %v1193, %v1192
      %v1206 = vpack.c.bf16 %v1195, %v1194
      %v1207 = vpack.c.bf16 %v1197, %v1196
      %v1208 = vpack.c.bf16 %v1199, %v1198
      %v1209 = vpack.c.bf16 %v1201, %v1200
      %v1218 = vunpack.c.l.b16 %v1202
      %v1219 = vunpack.c.h.b16 %v1202
      %v1220 = vunpack.c.l.b16 %v1203
      %v1221 = vunpack.c.h.b16 %v1203
      %v1222 = vunpack.c.l.b16 %v1204
      %v1223 = vunpack.c.h.b16 %v1204
      %v1224 = vunpack.c.l.b16 %v1205
      %v1225 = vunpack.c.h.b16 %v1205
      %v1226 = vunpack.c.l.b16 %v1206
      %v1227 = vunpack.c.h.b16 %v1206
      %v1228 = vunpack.c.l.b16 %v1207
      %v1229 = vunpack.c.h.b16 %v1207
      %v1230 = vunpack.c.l.b16 %v1208
      %v1231 = vunpack.c.h.b16 %v1208
      %v1232 = vunpack.c.l.b16 %v1209
      %v1233 = vunpack.c.h.b16 %v1209
      %v1234 = vpack.c.b16 %v1218, %v1218
      %v1235 = vpack.c.b16 %v1219, %v1219
      %v1236 = vpack.c.b16 %v1220, %v1220
      %v1237 = vpack.c.b16 %v1221, %v1221
      %v1238 = vpack.c.b16 %v1222, %v1222
      %v1239 = vpack.c.b16 %v1223, %v1223
      %v1240 = vpack.c.b16 %v1224, %v1224
      %v1241 = vpack.c.b16 %v1225, %v1225
      %v1242 = vpack.c.b16 %v1226, %v1226
      %v1243 = vpack.c.b16 %v1227, %v1227
      %v1244 = vpack.c.b16 %v1228, %v1228
      %v1245 = vpack.c.b16 %v1229, %v1229
      %v1246 = vpack.c.b16 %v1230, %v1230
      %v1247 = vpack.c.b16 %v1231, %v1231
      %v1248 = vpack.c.b16 %v1232, %v1232
      %v1249 = vpack.c.b16 %v1233, %v1233
      %1266 = vst [vmem:[#allocation8] sm:$0xf] %v1234
      %1267 = vst [vmem:[#allocation8 + $0x4] sm:$0xf] %v1235
      %1268 = vst [vmem:[#allocation8 + $0x8] sm:$0xf] %v1236
      %1269 = vst [vmem:[#allocation8 + $0xc] sm:$0xf] %v1237
      %1270 = vst [vmem:[#allocation8 + $0x10] sm:$0xf] %v1238
      %1271 = vst [vmem:[#allocation8 + $0x14] sm:$0xf] %v1239
      %1272 = vst [vmem:[#allocation8 + $0x18] sm:$0xf] %v1240
      %1273 = vst [vmem:[#allocation8 + $0x1c] sm:$0xf] %v1241
      %1274 = vst [vmem:[#allocation8 + $0x20] sm:$0xf] %v1242
      %1275 = vst [vmem:[#allocation8 + $0x24] sm:$0xf] %v1243
      %1276 = vst [vmem:[#allocation8 + $0x28] sm:$0xf] %v1244
      %1277 = vst [vmem:[#allocation8 + $0x2c] sm:$0xf] %v1245
      %1278 = vst [vmem:[#allocation8 + $0x30] sm:$0xf] %v1246
      %1279 = vst [vmem:[#allocation8 + $0x34] sm:$0xf] %v1247
      %1280 = vst [vmem:[#allocation8 + $0x38] sm:$0xf] %v1248
      %1281 = vst [vmem:[#allocation8 + $0x3c] sm:$0xf] %v1249
    $region41: #{tpu_custom_call.1} parent=1 // pred_fallthru
      _
    // Predicated region
    $region42: #{tpu_custom_call.1} parent=1 // pred_check
      _
    $region43: #{tpu_custom_call.1} parent=1 // pred_check_branch
      %1283 = sbr.rel (0) target = $region45
    $region44: #{tpu_custom_call.1} parent=1 // pred_region
      %s1285 = ssub.s32 1024, 1024
      %1286 = vsyncadd [#allocation5], %s1285
      %s1287 = sshll.u32 [#allocation8], 4
      %s1288 = int_to_ptr.vmem [resolvable:$true] %s1287
      %1293 = dma.vmem_to_hbm [thread:$0]  %s1288, 1024, %s6, [#allocation5], 64, 64, 4
    $region45: #{tpu_custom_call.1} parent=1 // pred_fallthru
      _
    // Predicated region
    $region46: #{tpu_custom_call.1} parent=1 // pred_check
      _
    $region47: #{tpu_custom_call.1} parent=1 // pred_check_branch
      %1295 = sbr.rel (0) target = $region49
    $region48: #{tpu_custom_call.1} parent=1 // pred_region
      %1296 = dma.done [#allocation5], 1024
    $region49: #{tpu_custom_call.1} parent=1 // pred_fallthru
      _
    %1297 = vsyncpa [#allocation4], 1
    %1298 = vsyncpa [#allocation7], 1
    %1299 = vsyncpa [#allocation5], 1

</llo_original>
